<compile_context>
chip_gen: v5e
topology: v5e:2x2
jax: 0.10.0
libtpu: 0.0.40
codegen_flags: <defaults>
</compile_context>

<pallas_src>
import functools

import jax
import jax.numpy as jnp
from jax.experimental import pallas as pl
from jax.experimental.pallas import tpu as pltpu


def _ls_ce_kernel(logits_ref, targets_ref, out_ref, *, epsilon: float):
    """Per-row label-smoothed cross entropy.

    loss_i = -sum_c smooth_c * log_softmax(x_i)_c
           = m_i + log(sum_c exp(x_ic - m_i)) - sum_c w_c * x_ic
    with w_c = eps/C + (1-eps)*[c == t_i]  (valid because sum_c smooth_c == 1).

    Reductions are over raw x (not the shifted values), so the per-element work
    is one sub+exp chain plus one cmp+select+mul chain -> fewer VALU ops and
    fewer live (TN, C) f32 temporaries than the naive formulation.
    """
    x = logits_ref[...].astype(jnp.float32)            # (TN, C)
    t = targets_ref[...]                                # (TN, 1) int32
    tn, c = x.shape

    m = jnp.max(x, axis=-1, keepdims=True)              # (TN, 1)
    lse = jnp.log(jnp.sum(jnp.exp(x - m), axis=-1, keepdims=True))  # (TN, 1)

    cls_ids = jax.lax.broadcasted_iota(jnp.int32, (tn, c), 1)
    on = jnp.float32(1.0 - epsilon + epsilon / c)
    off = jnp.float32(epsilon / c)
    w = jnp.where(cls_ids == t, on, off)                 # (TN, C)
    wsum = jnp.sum(w * x, axis=-1, keepdims=True)        # (TN, 1)

    out_ref[...] = m + lse - wsum


def _round_up(x: int, m: int) -> int:
    return (x + m - 1) // m * m


def _choose_tile_n(n_rows: int, c: int, itemsize: int, min_rows: int) -> int:
    # VMEM accounting per grid step:
    #   double-buffered input logits block : 2 * itemsize * TN * C bytes
    #   ~4 live f32 (TN, C) temporaries    : 16 * TN * C bytes
    # Keep the total under ~40 MiB so the pipeline fits the 48 MiB scoped limit
    # even on v7x (64 MiB physical VMEM / TensorCore); v5e/v6e (128 MiB) have
    # ample headroom.
    budget = 40 * 1024 * 1024
    per_elem_bytes = 2 * itemsize + 16
    tn = budget // (per_elem_bytes * max(1, c))
    tn = max(min_rows, min((tn // min_rows) * min_rows, 32768))
    # Blocks never exceed the array on the row axis (last block may be partial).
    tn = min(tn, (n_rows // min_rows) * min_rows)
    # Prefer >= 2 grid steps so both TensorCores get work on v7x megacore.
    tn = min(tn, _round_up(-(-n_rows // 2), min_rows))
    return int(max(min_rows, tn))


def label_smoothing_cross_entropy(inputs, targets, epsilon: float = 0.1):
    """inputs: (..., C) float logits; targets: (...) int class indices.

    Returns a scalar float32 loss (mean over all leading dims), matching
    PyTorch LabelSmoothingCrossEntropy.forward.
    Note: like the PyTorch module, there is no ignore_index handling.
    """
    num_classes = int(inputs.shape[-1])
    logits = inputs.reshape((-1, num_classes))          # keep original dtype
    tgt = targets.reshape((-1, 1)).astype(jnp.int32)
    n = int(logits.shape[0])

    itemsize = jnp.dtype(logits.dtype).itemsize
    min_rows = 16 if itemsize < 4 else 8                # bf16 native sublane tile

    # Only truly tiny batches are padded (<= 15 extra rows); large tensors are
    # never copied — ragged batches are handled by a cdiv grid whose last
    # (partial) block has its out-of-bounds rows dropped on writeback.
    if n < min_rows:
        pad = min_rows - n
        logits = jnp.pad(logits, ((0, pad), (0, 0)))
        tgt = jnp.pad(tgt, ((0, pad), (0, 0)))
    n_rows = int(logits.shape[0])

    tile_n = _choose_tile_n(n_rows, num_classes, itemsize, min_rows)
    grid = (pl.cdiv(n_rows, tile_n),)

    kernel = functools.partial(_ls_ce_kernel, epsilon=float(epsilon))

    cost = pl.CostEstimate(
        flops=7 * n * num_classes,
        transcendentals=n * num_classes,
        bytes_accessed=n * num_classes * itemsize + 8 * n,
    )

    per_row = pl.pallas_call(
        kernel,
        out_shape=jax.ShapeDtypeStruct((n_rows, 1), jnp.float32),
        grid_spec=pltpu.PrefetchScalarGridSpec(
            num_scalar_prefetch=0,
            grid=grid,
            in_specs=[
                pl.BlockSpec((tile_n, num_classes), lambda i: (i, 0)),
                pl.BlockSpec((tile_n, 1), lambda i: (i, 0)),
            ],
            out_specs=pl.BlockSpec((tile_n, 1), lambda i: (i, 0)),
        ),
        compiler_params=pltpu.CompilerParams(
            dimension_semantics=("parallel",),
            vmem_limit_bytes=48 * 1024 * 1024,
        ),
        cost_estimate=cost,
    )(logits, tgt)

    # mean over the real rows only (padded tail rows, if any, are excluded)
    return jnp.sum(per_row[:n, 0]) / jnp.float32(n)


def _reference(logits, targets, epsilon):
    logits = logits.astype(jnp.float32)
    num_classes = logits.shape[-1]
    logp = jax.nn.log_softmax(logits, axis=-1)
    one_hot = jax.nn.one_hot(targets, num_classes, dtype=jnp.float32)
    smooth = (1.0 - epsilon) * one_hot + epsilon / num_classes
    return jnp.mean(-jnp.sum(smooth * logp, axis=-1))


if __name__ == "__main__":
    key = jax.random.PRNGKey(0)
    k1, k2, k3, k4, k5, k6 = jax.random.split(key, 6)

    # case 1: f32 logits, batch multiple of 8 (also exercises the 2-step split)
    batch, num_classes = 16, 32
    logits = jax.random.normal(k1, (batch, num_classes), dtype=jnp.float32)
    targets = jax.random.randint(k2, (batch,), 0, num_classes, dtype=jnp.int32)
    loss = jax.block_until_ready(
        label_smoothing_cross_entropy(logits, targets, epsilon=0.1))
    ref = _reference(logits, targets, 0.1)
    assert jnp.allclose(loss, ref, atol=1e-5, rtol=1e-5), (loss, ref)

    # case 2: bf16 logits, ragged tiny batch (exercises the small-batch pad path)
    batch2, classes2 = 13, 40
    logits2 = jax.random.normal(k3, (batch2, classes2)).astype(jnp.bfloat16)
    targets2 = jax.random.randint(k4, (batch2,), 0, classes2, dtype=jnp.int32)
    loss2 = jax.block_until_ready(
        label_smoothing_cross_entropy(logits2, targets2, epsilon=0.1))
    ref2 = _reference(logits2, targets2, 0.1)
    assert jnp.allclose(loss2, ref2, atol=1e-4, rtol=1e-4), (loss2, ref2)

    # case 3: f32, ragged batch + class count just past a lane boundary
    # (exercises the cdiv grid with a partial last block and padded-lane sums)
    batch3, classes3 = 37, 129
    logits3 = jax.random.normal(k5, (batch3, classes3), dtype=jnp.float32)
    targets3 = jax.random.randint(k6, (batch3,), 0, classes3, dtype=jnp.int32)
    loss3 = jax.block_until_ready(
        label_smoothing_cross_entropy(logits3, targets3, epsilon=0.1))
    ref3 = _reference(logits3, targets3, 0.1)
    assert jnp.allclose(loss3, ref3, atol=1e-5, rtol=1e-5), (loss3, ref3)

    print("KERNEL_OK")
</pallas_src>

<mosaic_0001>
module attributes {stable_mosaic.version = 11 : i64} {
  func.func @_ls_ce_kernel(%arg0: i32, %arg1: memref<8x32xf32, #tpu.memory_space<vmem>>, %arg2: memref<8x1xi32, #tpu.memory_space<vmem>>, %arg3: memref<8x1xf32, #tpu.memory_space<vmem>>) attributes {dimension_semantics = [#tpu.dimension_semantics<parallel>], iteration_bounds = array<i64: 2>, scalar_prefetch = 0 : i64, scratch_operands = 0 : i64, tpu.core_type = #tpu.core_type<tc>, window_params = [{transform_indices = @transform_0, window_bounds = array<i64: 8, 32>}, {transform_indices = @transform_1, window_bounds = array<i64: 8, 1>}, {transform_indices = @transform_2, window_bounds = array<i64: 8, 1>}]} {
    %c0 = arith.constant 0 : index
    %c0_0 = arith.constant 0 : index
    %0 = vector.load %arg1[%c0, %c0_0] : memref<8x32xf32, #tpu.memory_space<vmem>>, vector<8x32xf32>
    %c0_1 = arith.constant 0 : index
    %c0_2 = arith.constant 0 : index
    %1 = vector.load %arg2[%c0_1, %c0_2] : memref<8x1xi32, #tpu.memory_space<vmem>>, vector<8x1xi32>
    %cst = arith.constant dense<0xFF800000> : vector<8xf32>
    %2 = vector.multi_reduction <maximumf>, %0, %cst [1] : vector<8x32xf32> to vector<8xf32>
    %3 = vector.shape_cast %2 : vector<8xf32> to vector<8x1xf32>
    %4 = vector.broadcast %3 : vector<8x1xf32> to vector<8x32xf32>
    %5 = arith.subf %0, %4 : vector<8x32xf32>
    %6 = math.exp %5 : vector<8x32xf32>
    %cst_3 = arith.constant dense<0.000000e+00> : vector<8xf32>
    %7 = vector.multi_reduction <add>, %6, %cst_3 [1] : vector<8x32xf32> to vector<8xf32>
    %8 = vector.shape_cast %7 : vector<8xf32> to vector<8x1xf32>
    %9 = math.log %8 : vector<8x1xf32>
    %10 = tpu.iota {dimensions = array<i32: 1>} : vector<8x32xi32>
    %11 = vector.broadcast %1 : vector<8x1xi32> to vector<8x32xi32>
    %12 = arith.cmpi eq, %10, %11 : vector<8x32xi32>
    %cst_4 = arith.constant 0.903124988 : f32
    %cst_5 = arith.constant 3.125000e-03 : f32
    %13 = vector.broadcast %cst_4 : f32 to vector<8x32xf32>
    %14 = vector.broadcast %cst_5 : f32 to vector<8x32xf32>
    %15 = arith.select %12, %13, %14 : vector<8x32xi1>, vector<8x32xf32>
    %16 = arith.mulf %15, %0 : vector<8x32xf32>
    %cst_6 = arith.constant dense<0.000000e+00> : vector<8xf32>
    %17 = vector.multi_reduction <add>, %16, %cst_6 [1] : vector<8x32xf32> to vector<8xf32>
    %18 = vector.shape_cast %17 : vector<8xf32> to vector<8x1xf32>
    %19 = arith.addf %3, %9 : vector<8x1xf32>
    %20 = arith.subf %19, %18 : vector<8x1xf32>
    %c0_7 = arith.constant 0 : index
    %c0_8 = arith.constant 0 : index
    %21 = vector.load %arg3[%c0_7, %c0_8] : memref<8x1xf32, #tpu.memory_space<vmem>>, vector<8x1xf32>
    tpu.vector_store %arg3[%c0_7, %c0_8], %20 {strides = array<i32>} : memref<8x1xf32, #tpu.memory_space<vmem>>, vector<8x1xf32>,
    return
  }
  func.func @transform_0(%arg0: i32) -> (i32, i32) {
    %c0_i32 = arith.constant 0 : i32
    %c0_i32_0 = arith.constant 0 : i32
    return %arg0, %c0_i32 : i32, i32
  }
  func.func @transform_1(%arg0: i32) -> (i32, i32) {
    %c0_i32 = arith.constant 0 : i32
    %c0_i32_0 = arith.constant 0 : i32
    return %arg0, %c0_i32 : i32, i32
  }
  func.func @transform_2(%arg0: i32) -> (i32, i32) {
    %c0_i32 = arith.constant 0 : i32
    %c0_i32_0 = arith.constant 0 : i32
    return %arg0, %c0_i32 : i32, i32
  }
}

</mosaic_0001>

<llo_original>
// kernel: tpu_custom_call.1
$region0: #{tpu_custom_call.1}
  #allocation0 [shape = 'u32[]', space=smem, size = 0x4, offset = 0x4, fixed_abs, tag = 'smem constant byte address 0x4 - core index']
  #allocation1 [shape = 'u32[72,128]{1,0:T(1,128)}', space=vmem, size = 0x9000, scoped, tag = 'internal scratch']
  %s0 = inlined_call_operand.vmem [shape: f32[16,32], index: 0, kind: input, shape index: {}]
  %s1 = inlined_call_operand.vmem [shape: s32[16,1], index: 1, kind: input, shape index: {}]
  %s2 = inlined_call_operand.vmem [shape: f32[16,1], index: 2, kind: output, shape index: {}]
  %s3 = sld [smem:[#allocation0]]
  $region41: #{tpu_custom_call.1} parent=0
    _
  %s5 = ssub.s32 1, %s3
  %s6 = scalar_select 0, %s5, %s3
  loop: start=0, step=1, limit=4
  $region2: #{tpu_custom_call.1} parent=0 // loop_pre_header
    _
  $region3: #{tpu_custom_call.1} parent=0 // loop_header
    %s8 = sphi 0, %s12
    %p9 = scmp.ge.s32.totalorder %s8, 4
    %s18 = sphi 0, %s20
    %s21 = sphi 0, %s18
    %s22 = sphi 0, %s21
    %s38 = sphi 0, %s22
    %s44 = sphi 0, %s46
    %s47 = sphi 0, %s44
    %s48 = sphi 0, %s47
    %s64 = sphi 0, %s48
    %s70 = sphi 0, %s72
    %s73 = sphi 0, %s70
    %s74 = sphi 0, %s73
    %s90 = sphi 0, %s74
  $region4: #{tpu_custom_call.1} parent=0 // loop_header_branch
    %11 = sbr.rel (%p9) target = $region8
  $region5: #{tpu_custom_call.1} parent=0 // loop_body
    %s13 = ssub.s32 %s8, 1
    %s14 = ssub.s32 %s8, 2
    %s15 = sadd.s32 %s8, 1
    %s16 = ssub.s32 %s8, %s15
    %p17 = scmp.eq.s32.totalorder %s16, 0
    %s19 = sadd.s32 %s18, 1
    %s20 = scalar_select %p17, %s18, %s19
    %p23 = pneg %p17
    %p24 = scmp.eq.s32.totalorder %s8, 1
    %p25 = por %p23, %p24
    %p26 = scmp.ne.s32.totalorder %s18, %s21
    %p27 = scmp.eq.s32.totalorder %s8, 0
    %p28 = por %p26, %p27
    %p29 = scmp.ne.s32.totalorder %s18, %s21
    %p30 = scmp.eq.s32.totalorder %s13, 1
    %p31 = por %p29, %p30
    %p32 = scmp.ne.s32.totalorder %s21, %s22
    %p33 = scmp.eq.s32.totalorder %s13, 0
    %p34 = por %p32, %p33
    %p35 = scmp.ne.s32.totalorder %s21, %s22
    %p36 = scmp.eq.s32.totalorder %s14, 1
    %p37 = por %p35, %p36
    %p39 = scmp.ne.s32.totalorder %s22, %s38
    %p40 = scmp.eq.s32.totalorder %s14, 0
    %p41 = por %p39, %p40
    %s42 = ssub.s32 %s8, %s15
    %p43 = scmp.eq.s32.totalorder %s42, 0
    %s45 = sadd.s32 %s44, 1
    %s46 = scalar_select %p43, %s44, %s45
    %p49 = pneg %p43
    %p50 = scmp.eq.s32.totalorder %s8, 1
    %p51 = por %p49, %p50
    %p52 = scmp.ne.s32.totalorder %s44, %s47
    %p53 = scmp.eq.s32.totalorder %s8, 0
    %p54 = por %p52, %p53
    %p55 = scmp.ne.s32.totalorder %s44, %s47
    %p56 = scmp.eq.s32.totalorder %s13, 1
    %p57 = por %p55, %p56
    %p58 = scmp.ne.s32.totalorder %s47, %s48
    %p59 = scmp.eq.s32.totalorder %s13, 0
    %p60 = por %p58, %p59
    %p61 = scmp.ne.s32.totalorder %s47, %s48
    %p62 = scmp.eq.s32.totalorder %s14, 1
    %p63 = por %p61, %p62
    %p65 = scmp.ne.s32.totalorder %s48, %s64
    %p66 = scmp.eq.s32.totalorder %s14, 0
    %p67 = por %p65, %p66
    %s68 = ssub.s32 %s8, %s15
    %p69 = scmp.eq.s32.totalorder %s68, 0
    %s71 = sadd.s32 %s70, 1
    %s72 = scalar_select %p69, %s70, %s71
    %p75 = pneg %p69
    %p76 = scmp.eq.s32.totalorder %s8, 1
    %p77 = por %p75, %p76
    %p78 = scmp.ne.s32.totalorder %s70, %s73
    %p79 = scmp.eq.s32.totalorder %s8, 0
    %p80 = por %p78, %p79
    %p81 = scmp.ne.s32.totalorder %s70, %s73
    %p82 = scmp.eq.s32.totalorder %s13, 1
    %p83 = por %p81, %p82
    %p84 = scmp.ne.s32.totalorder %s73, %s74
    %p85 = scmp.eq.s32.totalorder %s13, 0
    %p86 = por %p84, %p85
    %p87 = scmp.ne.s32.totalorder %s73, %s74
    %p88 = scmp.eq.s32.totalorder %s14, 1
    %p89 = por %p87, %p88
    %p91 = scmp.ne.s32.totalorder %s74, %s90
    %p92 = scmp.eq.s32.totalorder %s14, 0
    %p93 = por %p91, %p92
    %p94 = scmp.le.s32.totalorder 1, %s8
    %p95 = scmp.lt.s32.totalorder %s8, 3
    %p96 = pnand %p94, %p95
    %p97 = pneg %p96
    // Predicated region
    $region9: #{tpu_custom_call.1} parent=5 // pred_check
      _
    $region10: #{tpu_custom_call.1} parent=5 // pred_check_branch
      %99 = sbr.rel (%p96) target = $region12
    $region11: #{tpu_custom_call.1} parent=5 // pred_region
      %s100 = ssub.s32 %s8, 1
    $region12: #{tpu_custom_call.1} parent=5 // pred_fallthru
      _
    %p101 = scmp.lt.s32.totalorder %s8, 2
    // Predicated region
    $region13: #{tpu_custom_call.1} parent=5 // pred_check
      %p102 = pneg %p101
    $region14: #{tpu_custom_call.1} parent=5 // pred_check_branch
      %104 = sbr.rel (%p102) target = $region16
    $region15: #{tpu_custom_call.1} parent=5 // pred_region
      // Predicated region
      $region17: #{tpu_custom_call.1} parent=15 // pred_check
        %p105 = pneg %p28
      $region18: #{tpu_custom_call.1} parent=15 // pred_check_branch
        %107 = sbr.rel (%p105) target = $region20
      $region19: #{tpu_custom_call.1} parent=15 // pred_region
        %p108 = scmp.lt.s32.totalorder %s8, 1
        %s109 = scalar_select %p108, %s8, 1
        %s110 = smul.addr %s109, 8
        %s111 = scalar_lea.vmem %s0, %s110
      $region20: #{tpu_custom_call.1} parent=15 // pred_fallthru
        _
      // Predicated region
      $region21: #{tpu_custom_call.1} parent=15 // pred_check
        %p112 = pneg %p54
      $region22: #{tpu_custom_call.1} parent=15 // pred_check_branch
        %114 = sbr.rel (%p112) target = $region24
      $region23: #{tpu_custom_call.1} parent=15 // pred_region
        %p115 = scmp.lt.s32.totalorder %s8, 1
        %s116 = scalar_select %p115, %s8, 1
        %s117 = smul.addr %s116, 8
        %s118 = scalar_lea.vmem %s1, %s117
      $region24: #{tpu_custom_call.1} parent=15 // pred_fallthru
        _
    $region16: #{tpu_custom_call.1} parent=5 // pred_fallthru
      _
    %p119 = scmp.le.s32.totalorder 1, %s8
    %p120 = scmp.lt.s32.totalorder %s8, 3
    %p121 = pnand %p119, %p120
    %p122 = pneg %p121
    // Predicated region
    $region25: #{tpu_custom_call.1} parent=5 // pred_check
      _
    $region26: #{tpu_custom_call.1} parent=5 // pred_check_branch
      %124 = sbr.rel (%p121) target = $region28
    $region27: #{tpu_custom_call.1} parent=5 // pred_region
      %s125 = ssub.s32 %s8, 1
      %p126 = scmp.lt.s32.totalorder %s13, 1
      %s127 = scalar_select %p126, %s13, 1
      %s128 = smul.addr %s127, 8
      %s129 = scalar_lea.vmem %s0, %s128
      %p130 = pneg %p34
      %p131 = pneg %p31
      %p132 = scmp.lt.s32.totalorder %s13, 1
      %s133 = scalar_select %p132, %s13, 1
      %s134 = smul.addr %s133, 8
      %s135 = scalar_lea.vmem %s1, %s134
      %p136 = pneg %p60
      %p137 = pneg %p57
      %p138 = pneg %p86
      %p139 = pneg %p83
      %p140 = scmp.lt.s32.totalorder %s13, 1
      %s141 = scalar_select %p140, %s13, 1
      %s142 = smul.addr %s141, 8
      %s143 = scalar_lea.vmem %s2, %s142
      %p144 = scmp.lt.s32.totalorder %s13, 1
      %s145 = scalar_select %p144, %s13, 1
      %s146 = smul.addr %s145, 8
      %s147 = scalar_lea.vmem %s0, %s146
      %p148 = scmp.lt.s32.totalorder %s13, 1
      %s149 = scalar_select %p148, %s13, 1
      %s150 = smul.addr %s149, 8
      %s151 = scalar_lea.vmem %s1, %s150
      %p152 = scmp.lt.s32.totalorder %s13, 1
      %s153 = scalar_select %p152, %s13, 1
      %s154 = smul.addr %s153, 8
      %s155 = scalar_lea.vmem %s2, %s154
      %v156 = vld [vmem:[%s147] sm:$0xff]
      %v157 = vld [vmem:[%s151] sm:$0xff]
      %vm158 = vcmask 261120
      %v159 = vsel %vm158, %v156, -inf
      %160 = vmax.xlane.f32.xlu0 %v159
      %v161 = vpop.xlane.xlu0 %160
      %v162 = vsub.f32 %v156, %v161
      %v163 = vmul.f32 %v162, 1.442695
      %v164 = vpow.pop %v163
      %v165 = vsel %vm158, %v164, 0.0
      %166 = vadd.xlane.f32.xlu0 %v165
      %v167 = vpop.xlane.xlu0 %166
      %v168 = vlog2.pop %v167
      %v169 = vmul.f32 %v168, 0.6931472
      %v170 = vlaneseq
      %v171 = vand.u32 %v170, 127
      %172 = vset.pattern.permute.xlu0 0
      %173 = vperm.xlu0 %172, %v157
      %v174 = vpop.permute.xlu0 %173
      %vm175 = vcmp.eq.s32.totalorder %v171, %v174
      %v176 = vsel %vm175, 0.903125, 0.003125
      %v177 = vmul.f32 %v176, %v156
      %v178 = vsel %vm158, %v177, 0.0
      %179 = vadd.xlane.f32.xlu0 %v178
      %v180 = vpop.xlane.xlu0 %179
      %v181 = vadd.f32 %v161, %v169
      %v182 = vsub.f32 %v181, %v180
      %vm183 = vcmask 7168
      %184 = vst.msk [vmem:[%s155] sm:$0xff] %vm183, %v182
      %p185 = scmp.lt.s32.totalorder %s13, 1
      %s186 = scalar_select %p185, %s13, 1
      %s187 = smul.addr %s186, 8
      %s188 = scalar_lea.vmem %s2, %s187
      // Predicated region
      $region29: #{tpu_custom_call.1} parent=27 // pred_check
        %p189 = pneg %p83
      $region30: #{tpu_custom_call.1} parent=27 // pred_check_branch
        %191 = sbr.rel (%p189) target = $region32
      $region31: #{tpu_custom_call.1} parent=27 // pred_region
        _
      $region32: #{tpu_custom_call.1} parent=27 // pred_fallthru
        _
    $region28: #{tpu_custom_call.1} parent=5 // pred_fallthru
      _
    %p192 = scmp.le.s32.totalorder 2, %s8
    // Predicated region
    $region33: #{tpu_custom_call.1} parent=5 // pred_check
      %p193 = pneg %p192
    $region34: #{tpu_custom_call.1} parent=5 // pred_check_branch
      %195 = sbr.rel (%p193) target = $region36
    $region35: #{tpu_custom_call.1} parent=5 // pred_region
      %s196 = ssub.s32 %s8, 2
      // Predicated region
      $region37: #{tpu_custom_call.1} parent=35 // pred_check
        %p197 = pneg %p89
      $region38: #{tpu_custom_call.1} parent=35 // pred_check_branch
        %199 = sbr.rel (%p197) target = $region40
      $region39: #{tpu_custom_call.1} parent=35 // pred_region
        %p200 = scmp.lt.s32.totalorder %s14, 1
        %s201 = scalar_select %p200, %s14, 1
        %s202 = smul.addr %s201, 8
        %s203 = scalar_lea.vmem %s2, %s202
      $region40: #{tpu_custom_call.1} parent=35 // pred_fallthru
        _
    $region36: #{tpu_custom_call.1} parent=5 // pred_fallthru
      _
  $region6: #{tpu_custom_call.1} parent=0 // loop_footer
    %s12 = sadd.s32 1, %s8
  $region7: #{tpu_custom_call.1} parent=0 // loop_footer_branch
    %7 = sbr.rel target = $region3
  $region8: #{tpu_custom_call.1} parent=0 // loop_exit
    _

</llo_original>
